<compile_context>
chip_gen: v7x
topology: tpu7x:2x2x1
jax: 0.10.0
libtpu: 0.0.40
codegen_flags: <defaults>
</compile_context>

<pallas_src>
import functools

import jax
import jax.numpy as jnp
from jax.experimental import pallas as pl
from jax.experimental.pallas import tpu as pltpu


def se_kernel(x_ref, w1t_ref, b1_ref, w2t_ref, b2_ref, o_ref, *, alpha):
    x = x_ref[...]                                   # (TB, C, HW)
    xf = x.astype(jnp.float32)                       # f32 math, cast only on store
    # Squeeze: global average pool over spatial (lane reduction per (C, HW) slab).
    pooled = jnp.mean(xf, axis=2)                    # (TB, C)
    # Excitation, batched over TB: fc1 -> ReLU -> fc2 -> sigmoid.
    h = jnp.dot(pooled, w1t_ref[...], preferred_element_type=jnp.float32) + b1_ref[...]
    h = jnp.maximum(h, 0.0)                          # (TB, Cr)
    s = jnp.dot(h, w2t_ref[...], preferred_element_type=jnp.float32) + b2_ref[...]
    s = jax.nn.sigmoid(s)                            # (TB, C), sigmoid on EUP (free slot)
    # Blend and scale: x * (alpha * s + (1 - alpha)), broadcast over spatial.
    scale = alpha * s + (1.0 - alpha)                # (TB, C)
    o_ref[...] = (xf * scale[:, :, None]).astype(o_ref.dtype)


def _choose_tb(batch, per_elem_bytes, target_bytes=2 << 20):
    """Pick batch-elements-per-block: ~target_bytes of x per block, at least two
    grid steps when possible (v7x dual TensorCore), and a divisor of batch so
    there is no ragged final block."""
    tb = max(1, min(batch, target_bytes // max(per_elem_bytes, 1)))
    if batch > 1:
        tb = min(tb, -(-batch // 2))     # keep >= 2 grid steps
    while batch % tb != 0:               # prefer an exact divisor of batch
        tb -= 1
    return int(tb)


def se_layer(x, w1, b1, w2, b2, alpha):
    """x: (B, C, H, W); w1: (Cr, C); b1: (Cr,); w2: (C, Cr); b2: (C,)."""
    B, C, H, W = x.shape
    HW = H * W
    Cr = w1.shape[0]

    # Flatten spatial onto the lane axis. Note: an HW that is not a multiple of
    # 128 still compiles (block dim == full array dim) but pays masked partial
    # stores; fold/pad spatial upstream if that matters for deployment shapes.
    x3 = x.reshape(B, C, HW)
    w1t = jnp.asarray(w1).T          # (C, Cr)
    w2t = jnp.asarray(w2).T          # (Cr, C)
    b1r = jnp.asarray(b1).reshape(1, Cr)
    b2r = jnp.asarray(b2).reshape(1, C)

    per_elem_bytes = C * HW * x.dtype.itemsize
    TB = _choose_tb(B, per_elem_bytes)
    block_bytes = TB * per_elem_bytes
    # Double-buffered input + output blocks plus tiny weights; keep headroom and
    # stay within every generation's physical VMEM (64 MiB on v7x, 128 on v5e/v6e).
    vmem_limit = int(min(48 * 2**20, max(32 * 2**20, 4 * block_bytes + (2 << 20))))

    out = pl.pallas_call(
        functools.partial(se_kernel, alpha=float(alpha)),
        out_shape=jax.ShapeDtypeStruct((B, C, HW), x.dtype),
        grid_spec=pltpu.PrefetchScalarGridSpec(
            num_scalar_prefetch=0,
            grid=(B // TB,),
            in_specs=[
                pl.BlockSpec((TB, C, HW), lambda b: (b, 0, 0)),
                pl.BlockSpec((C, Cr), lambda b: (0, 0)),
                pl.BlockSpec((1, Cr), lambda b: (0, 0)),
                pl.BlockSpec((Cr, C), lambda b: (0, 0)),
                pl.BlockSpec((1, C), lambda b: (0, 0)),
            ],
            out_specs=pl.BlockSpec((TB, C, HW), lambda b: (b, 0, 0)),
        ),
        compiler_params=pltpu.CompilerParams(
            dimension_semantics=("parallel",),
            vmem_limit_bytes=vmem_limit),
    )(x3, w1t, b1r, w2t, b2r)
    return out.reshape(B, C, H, W)


def se_ref(x, w1, b1, w2, b2, alpha):
    """Pure-JAX reference mirroring the PyTorch forward."""
    B, C, _, _ = x.shape
    y = x.astype(jnp.float32).mean(axis=(2, 3))      # AdaptiveAvgPool2d(1).view(b, c)
    h = jnp.maximum(y @ w1.T + b1, 0.0)              # Linear + ReLU
    s = jax.nn.sigmoid(h @ w2.T + b2)                # Linear + Sigmoid
    scale = (alpha * s + (1.0 - alpha)).reshape(B, C, 1, 1)
    return (x.astype(jnp.float32) * scale).astype(x.dtype)


if __name__ == "__main__":
    # Small shapes consistent with the module: channel=32, reduction=16.
    B, C, H, W = 8, 32, 16, 16
    reduction = 16
    Cr = C // reduction
    alpha = 0.5

    key = jax.random.PRNGKey(0)
    kx, k1, k2, k3, k4 = jax.random.split(key, 5)

    x = jax.random.normal(kx, (B, C, H, W), dtype=jnp.float32)

    # Deterministic PyTorch-like Linear init: U(-1/sqrt(fan_in), 1/sqrt(fan_in)).
    bound1 = 1.0 / (C ** 0.5)
    w1 = jax.random.uniform(k1, (Cr, C), minval=-bound1, maxval=bound1, dtype=jnp.float32)
    b1 = jax.random.uniform(k2, (Cr,), minval=-bound1, maxval=bound1, dtype=jnp.float32)
    bound2 = 1.0 / (Cr ** 0.5)
    w2 = jax.random.uniform(k3, (C, Cr), minval=-bound2, maxval=bound2, dtype=jnp.float32)
    b2 = jax.random.uniform(k4, (C,), minval=-bound2, maxval=bound2, dtype=jnp.float32)

    out = jax.block_until_ready(se_layer(x, w1, b1, w2, b2, alpha))
    ref = jax.block_until_ready(se_ref(x, w1, b1, w2, b2, alpha))

    assert out.shape == x.shape and out.dtype == x.dtype
    assert jnp.allclose(out, ref, rtol=1e-5, atol=1e-5), "mismatch vs reference"
    print("KERNEL_OK")
</pallas_src>

<mosaic_0001>
module attributes {stable_mosaic.version = 11 : i64} {
  func.func @se_kernel(%arg0: i32, %arg1: memref<4x32x256xf32, #tpu.memory_space<vmem>>, %arg2: memref<32x2xf32, #tpu.memory_space<vmem>>, %arg3: memref<1x2xf32, #tpu.memory_space<vmem>>, %arg4: memref<2x32xf32, #tpu.memory_space<vmem>>, %arg5: memref<1x32xf32, #tpu.memory_space<vmem>>, %arg6: memref<4x32x256xf32, #tpu.memory_space<vmem>>) attributes {dimension_semantics = [#tpu.dimension_semantics<parallel>], iteration_bounds = array<i64: 2>, scalar_prefetch = 0 : i64, scratch_operands = 0 : i64, tpu.core_type = #tpu.core_type<tc>, window_params = [{transform_indices = @transform_0, window_bounds = array<i64: 4, 32, 256>}, {pipeline_mode = #tpu.pipeline_mode<synchronous>, transform_indices = @transform_1, window_bounds = array<i64: 32, 2>}, {pipeline_mode = #tpu.pipeline_mode<synchronous>, transform_indices = @transform_2, window_bounds = array<i64: 1, 2>}, {pipeline_mode = #tpu.pipeline_mode<synchronous>, transform_indices = @transform_3, window_bounds = array<i64: 2, 32>}, {pipeline_mode = #tpu.pipeline_mode<synchronous>, transform_indices = @transform_4, window_bounds = array<i64: 1, 32>}, {transform_indices = @transform_5, window_bounds = array<i64: 4, 32, 256>}]} {
    %c0 = arith.constant 0 : index
    %c0_0 = arith.constant 0 : index
    %c0_1 = arith.constant 0 : index
    %0 = vector.load %arg1[%c0, %c0_0, %c0_1] : memref<4x32x256xf32, #tpu.memory_space<vmem>>, vector<4x32x256xf32>
    %cst = arith.constant dense<0.000000e+00> : vector<4x32xf32>
    %1 = vector.multi_reduction <add>, %0, %cst [2] : vector<4x32x256xf32> to vector<4x32xf32>
    %cst_2 = arith.constant 2.560000e+02 : f32
    %2 = vector.broadcast %cst_2 : f32 to vector<4x32xf32>
    %3 = arith.divf %1, %2 : vector<4x32xf32>
    %c0_3 = arith.constant 0 : index
    %c0_4 = arith.constant 0 : index
    %4 = vector.load %arg2[%c0_3, %c0_4] : memref<32x2xf32, #tpu.memory_space<vmem>>, vector<32x2xf32>
    %cst_5 = arith.constant dense<0.000000e+00> : vector<4x2xf32>
    %5 = tpu.matmul %3, %4, %cst_5 {dimension_numbers = #tpu.dot_dimension_numbers<[1], [0], [0], [1], [0, 0, 1, 1], [], []>} : vector<4x32xf32>, vector<32x2xf32>, vector<4x2xf32> -> vector<4x2xf32>
    %c0_6 = arith.constant 0 : index
    %c0_7 = arith.constant 0 : index
    %6 = vector.load %arg3[%c0_6, %c0_7] : memref<1x2xf32, #tpu.memory_space<vmem>>, vector<1x2xf32>
    %7 = vector.broadcast %6 : vector<1x2xf32> to vector<4x2xf32>
    %8 = arith.addf %5, %7 : vector<4x2xf32>
    %cst_8 = arith.constant 0.000000e+00 : f32
    %9 = vector.broadcast %cst_8 : f32 to vector<4x2xf32>
    %10 = arith.maximumf %8, %9 : vector<4x2xf32>
    %c0_9 = arith.constant 0 : index
    %c0_10 = arith.constant 0 : index
    %11 = vector.load %arg4[%c0_9, %c0_10] : memref<2x32xf32, #tpu.memory_space<vmem>>, vector<2x32xf32>
    %cst_11 = arith.constant dense<0.000000e+00> : vector<4x32xf32>
    %12 = tpu.matmul %10, %11, %cst_11 {dimension_numbers = #tpu.dot_dimension_numbers<[1], [0], [0], [1], [0, 0, 1, 1], [], []>} : vector<4x2xf32>, vector<2x32xf32>, vector<4x32xf32> -> vector<4x32xf32>
    %c0_12 = arith.constant 0 : index
    %c0_13 = arith.constant 0 : index
    %13 = vector.load %arg5[%c0_12, %c0_13] : memref<1x32xf32, #tpu.memory_space<vmem>>, vector<1x32xf32>
    %14 = vector.broadcast %13 : vector<1x32xf32> to vector<4x32xf32>
    %15 = arith.addf %12, %14 : vector<4x32xf32>
    %16 = arith.negf %15 : vector<4x32xf32>
    %17 = math.exp %16 : vector<4x32xf32>
    %cst_14 = arith.constant 1.000000e+00 : f32
    %18 = vector.broadcast %cst_14 : f32 to vector<4x32xf32>
    %19 = arith.addf %18, %17 : vector<4x32xf32>
    %20 = arith.divf %18, %19 : vector<4x32xf32>
    %cst_15 = arith.constant 5.000000e-01 : f32
    %21 = vector.broadcast %cst_15 : f32 to vector<4x32xf32>
    %22 = arith.mulf %21, %20 : vector<4x32xf32>
    %cst_16 = arith.constant 5.000000e-01 : f32
    %23 = vector.broadcast %cst_16 : f32 to vector<4x32xf32>
    %24 = arith.addf %22, %23 : vector<4x32xf32>
    %25 = vector.shape_cast %24 : vector<4x32xf32> to vector<4x32x1xf32>
    %26 = vector.broadcast %25 : vector<4x32x1xf32> to vector<4x32x256xf32>
    %27 = arith.mulf %0, %26 : vector<4x32x256xf32>
    %c0_17 = arith.constant 0 : index
    %c0_18 = arith.constant 0 : index
    %c0_19 = arith.constant 0 : index
    %28 = vector.load %arg6[%c0_17, %c0_18, %c0_19] : memref<4x32x256xf32, #tpu.memory_space<vmem>>, vector<4x32x256xf32>
    tpu.vector_store %arg6[%c0_17, %c0_18, %c0_19], %27 {strides = array<i32>} : memref<4x32x256xf32, #tpu.memory_space<vmem>>, vector<4x32x256xf32>,
    return
  }
  func.func @transform_0(%arg0: i32) -> (i32, i32, i32) {
    %c0_i32 = arith.constant 0 : i32
    %c0_i32_0 = arith.constant 0 : i32
    %c0_i32_1 = arith.constant 0 : i32
    return %arg0, %c0_i32, %c0_i32_0 : i32, i32, i32
  }
  func.func @transform_1(%arg0: i32) -> (i32, i32) {
    %c0_i32 = arith.constant 0 : i32
    %c0_i32_0 = arith.constant 0 : i32
    %c0_i32_1 = arith.constant 0 : i32
    return %c0_i32, %c0_i32_0 : i32, i32
  }
  func.func @transform_2(%arg0: i32) -> (i32, i32) {
    %c0_i32 = arith.constant 0 : i32
    %c0_i32_0 = arith.constant 0 : i32
    %c0_i32_1 = arith.constant 0 : i32
    return %c0_i32, %c0_i32_0 : i32, i32
  }
  func.func @transform_3(%arg0: i32) -> (i32, i32) {
    %c0_i32 = arith.constant 0 : i32
    %c0_i32_0 = arith.constant 0 : i32
    %c0_i32_1 = arith.constant 0 : i32
    return %c0_i32, %c0_i32_0 : i32, i32
  }
  func.func @transform_4(%arg0: i32) -> (i32, i32) {
    %c0_i32 = arith.constant 0 : i32
    %c0_i32_0 = arith.constant 0 : i32
    %c0_i32_1 = arith.constant 0 : i32
    return %c0_i32, %c0_i32_0 : i32, i32
  }
  func.func @transform_5(%arg0: i32) -> (i32, i32, i32) {
    %c0_i32 = arith.constant 0 : i32
    %c0_i32_0 = arith.constant 0 : i32
    %c0_i32_1 = arith.constant 0 : i32
    return %arg0, %c0_i32, %c0_i32_0 : i32, i32, i32
  }
}

</mosaic_0001>

<llo_original>
// kernel: tpu_custom_call.1
$region0: #{tpu_custom_call.1}
  #allocation0 [shape = 'u32[]', space=smem, size = 0x4, offset = 0x4, fixed_abs, tag = 'smem constant byte address 0x4 - core index']
  #allocation1 [shape = 'u32[144,128]{1,0:T(1,128)}', space=vmem, size = 0x12000, scoped, tag = 'internal scratch']
  %s0 = inlined_call_operand.hbm [shape: f32[8,32,256], index: 0, kind: input, shape index: {}]
  %s1 = inlined_call_operand.vmem [shape: f32[32,2], index: 1, kind: input, shape index: {}]
  %s2 = inlined_call_operand.vmem [shape: f32[1,2], index: 2, kind: input, shape index: {}]
  %s3 = inlined_call_operand.vmem [shape: f32[2,32], index: 3, kind: input, shape index: {}]
  %s4 = inlined_call_operand.vmem [shape: f32[1,32], index: 4, kind: input, shape index: {}]
  %s5 = inlined_call_operand.hbm [shape: f32[8,32,256], index: 5, kind: output, shape index: {}]
  %s6 = sld [smem:[#allocation0]]
  $region57: #{tpu_custom_call.1} parent=0
    _
  %s8 = ssub.s32 1, %s6
  %s9 = scalar_select 0, %s8, %s6
  $region1: #{tpu_custom_call.1} parent=0
    #allocation2 [shape = 'u8[262144]{0}', space=vmem, size = 0x40000, scoped, tag = 'input window, operand 0']
    #allocation3 [shape = 's32[2]{0}', space=sflag, size = 0x8, scoped, tag = 'scoped memory for tpu_custom_call.1']
    #allocation4 [shape = 's32[2]{0}', space=sflag, size = 0x8, scoped, tag = 'scoped memory for tpu_custom_call.1']
    #allocation5 [shape = 'u8[262144]{0}', space=vmem, size = 0x40000, scoped, tag = 'output window, operand 0']
    %10 = vsyncpa [#allocation3], 0
    %s11 = scalar_lea.sflag [#allocation3], 1
    %12 = vsyncpa %s11, 0
    %13 = vsyncpa [#allocation4], 0
    %s14 = scalar_lea.sflag [#allocation4], 1
    %15 = vsyncpa %s14, 0
    loop: start=0, step=1, limit=4
    $region2: #{tpu_custom_call.1} parent=1 // loop_pre_header
      _
    $region3: #{tpu_custom_call.1} parent=1 // loop_header
      %s17 = sphi 0, %s21
      %p18 = scmp.ge.s32.totalorder %s17, 4
      %s27 = sphi 0, %s29
      %s30 = sphi 0, %s27
      %s31 = sphi 0, %s30
      %s47 = sphi 0, %s31
      %s51 = sphi 0, %s51
      %s53 = sphi 0, %s51
      %s54 = sphi 0, %s53
      %s68 = sphi 0, %s54
      %s72 = sphi 0, %s72
      %s74 = sphi 0, %s72
      %s75 = sphi 0, %s74
      %s89 = sphi 0, %s75
      %s93 = sphi 0, %s93
      %s95 = sphi 0, %s93
      %s96 = sphi 0, %s95
      %s110 = sphi 0, %s96
      %s114 = sphi 0, %s114
      %s116 = sphi 0, %s114
      %s117 = sphi 0, %s116
      %s131 = sphi 0, %s117
      %s137 = sphi 0, %s139
      %s140 = sphi 0, %s137
      %s141 = sphi 0, %s140
      %s157 = sphi 0, %s141
    $region4: #{tpu_custom_call.1} parent=1 // loop_header_branch
      %20 = sbr.rel (%p18) target = $region8
    $region5: #{tpu_custom_call.1} parent=1 // loop_body
      %s22 = ssub.s32 %s17, 1
      %s23 = ssub.s32 %s17, 2
      %s24 = sadd.s32 %s17, 1
      %s25 = ssub.s32 %s17, %s24
      %p26 = scmp.eq.s32.totalorder %s25, 0
      %s28 = sadd.s32 %s27, 1
      %s29 = scalar_select %p26, %s27, %s28
      %p32 = pneg %p26
      %p33 = scmp.eq.s32.totalorder %s17, 1
      %p34 = por %p32, %p33
      %p35 = scmp.ne.s32.totalorder %s27, %s30
      %p36 = scmp.eq.s32.totalorder %s17, 0
      %p37 = por %p35, %p36
      %p38 = scmp.ne.s32.totalorder %s27, %s30
      %p39 = scmp.eq.s32.totalorder %s22, 1
      %p40 = por %p38, %p39
      %p41 = scmp.ne.s32.totalorder %s30, %s31
      %p42 = scmp.eq.s32.totalorder %s22, 0
      %p43 = por %p41, %p42
      %p44 = scmp.ne.s32.totalorder %s30, %s31
      %p45 = scmp.eq.s32.totalorder %s23, 1
      %p46 = por %p44, %p45
      %p48 = scmp.ne.s32.totalorder %s31, %s47
      %p49 = scmp.eq.s32.totalorder %s23, 0
      %p50 = por %p48, %p49
      %s52 = sadd.s32 %s51, 1
      %p55 = scmp.eq.s32.totalorder %s17, 1
      %p56 = scmp.ne.s32.totalorder %s51, %s53
      %p57 = scmp.eq.s32.totalorder %s17, 0
      %p58 = por %p56, %p57
      %p59 = scmp.ne.s32.totalorder %s51, %s53
      %p60 = scmp.eq.s32.totalorder %s22, 1
      %p61 = por %p59, %p60
      %p62 = scmp.ne.s32.totalorder %s53, %s54
      %p63 = scmp.eq.s32.totalorder %s22, 0
      %p64 = por %p62, %p63
      %p65 = scmp.ne.s32.totalorder %s53, %s54
      %p66 = scmp.eq.s32.totalorder %s23, 1
      %p67 = por %p65, %p66
      %p69 = scmp.ne.s32.totalorder %s54, %s68
      %p70 = scmp.eq.s32.totalorder %s23, 0
      %p71 = por %p69, %p70
      %s73 = sadd.s32 %s72, 1
      %p76 = scmp.eq.s32.totalorder %s17, 1
      %p77 = scmp.ne.s32.totalorder %s72, %s74
      %p78 = scmp.eq.s32.totalorder %s17, 0
      %p79 = por %p77, %p78
      %p80 = scmp.ne.s32.totalorder %s72, %s74
      %p81 = scmp.eq.s32.totalorder %s22, 1
      %p82 = por %p80, %p81
      %p83 = scmp.ne.s32.totalorder %s74, %s75
      %p84 = scmp.eq.s32.totalorder %s22, 0
      %p85 = por %p83, %p84
      %p86 = scmp.ne.s32.totalorder %s74, %s75
      %p87 = scmp.eq.s32.totalorder %s23, 1
      %p88 = por %p86, %p87
      %p90 = scmp.ne.s32.totalorder %s75, %s89
      %p91 = scmp.eq.s32.totalorder %s23, 0
      %p92 = por %p90, %p91
      %s94 = sadd.s32 %s93, 1
      %p97 = scmp.eq.s32.totalorder %s17, 1
      %p98 = scmp.ne.s32.totalorder %s93, %s95
      %p99 = scmp.eq.s32.totalorder %s17, 0
      %p100 = por %p98, %p99
      %p101 = scmp.ne.s32.totalorder %s93, %s95
      %p102 = scmp.eq.s32.totalorder %s22, 1
      %p103 = por %p101, %p102
      %p104 = scmp.ne.s32.totalorder %s95, %s96
      %p105 = scmp.eq.s32.totalorder %s22, 0
      %p106 = por %p104, %p105
      %p107 = scmp.ne.s32.totalorder %s95, %s96
      %p108 = scmp.eq.s32.totalorder %s23, 1
      %p109 = por %p107, %p108
      %p111 = scmp.ne.s32.totalorder %s96, %s110
      %p112 = scmp.eq.s32.totalorder %s23, 0
      %p113 = por %p111, %p112
      %s115 = sadd.s32 %s114, 1
      %p118 = scmp.eq.s32.totalorder %s17, 1
      %p119 = scmp.ne.s32.totalorder %s114, %s116
      %p120 = scmp.eq.s32.totalorder %s17, 0
      %p121 = por %p119, %p120
      %p122 = scmp.ne.s32.totalorder %s114, %s116
      %p123 = scmp.eq.s32.totalorder %s22, 1
      %p124 = por %p122, %p123
      %p125 = scmp.ne.s32.totalorder %s116, %s117
      %p126 = scmp.eq.s32.totalorder %s22, 0
      %p127 = por %p125, %p126
      %p128 = scmp.ne.s32.totalorder %s116, %s117
      %p129 = scmp.eq.s32.totalorder %s23, 1
      %p130 = por %p128, %p129
      %p132 = scmp.ne.s32.totalorder %s117, %s131
      %p133 = scmp.eq.s32.totalorder %s23, 0
      %p134 = por %p132, %p133
      %s135 = ssub.s32 %s17, %s24
      %p136 = scmp.eq.s32.totalorder %s135, 0
      %s138 = sadd.s32 %s137, 1
      %s139 = scalar_select %p136, %s137, %s138
      %p142 = pneg %p136
      %p143 = scmp.eq.s32.totalorder %s17, 1
      %p144 = por %p142, %p143
      %p145 = scmp.ne.s32.totalorder %s137, %s140
      %p146 = scmp.eq.s32.totalorder %s17, 0
      %p147 = por %p145, %p146
      %p148 = scmp.ne.s32.totalorder %s137, %s140
      %p149 = scmp.eq.s32.totalorder %s22, 1
      %p150 = por %p148, %p149
      %p151 = scmp.ne.s32.totalorder %s140, %s141
      %p152 = scmp.eq.s32.totalorder %s22, 0
      %p153 = por %p151, %p152
      %p154 = scmp.ne.s32.totalorder %s140, %s141
      %p155 = scmp.eq.s32.totalorder %s23, 1
      %p156 = por %p154, %p155
      %p158 = scmp.ne.s32.totalorder %s141, %s157
      %p159 = scmp.eq.s32.totalorder %s23, 0
      %p160 = por %p158, %p159
      %p161 = scmp.le.s32.totalorder 1, %s17
      %p162 = scmp.lt.s32.totalorder %s17, 3
      %p163 = pnand %p161, %p162
      %p164 = pneg %p163
      // Predicated region
      $region9: #{tpu_custom_call.1} parent=5 // pred_check
        _
      $region10: #{tpu_custom_call.1} parent=5 // pred_check_branch
        %166 = sbr.rel (%p163) target = $region12
      $region11: #{tpu_custom_call.1} parent=5 // pred_region
        %s167 = ssub.s32 %s17, 1
        // Predicated region
        $region13: #{tpu_custom_call.1} parent=11 // pred_check
          %p168 = pneg %p64
        $region14: #{tpu_custom_call.1} parent=11 // pred_check_branch
          %170 = sbr.rel (%p168) target = $region16
        $region15: #{tpu_custom_call.1} parent=11 // pred_region
          _
        $region16: #{tpu_custom_call.1} parent=11 // pred_fallthru
          _
        // Predicated region
        $region17: #{tpu_custom_call.1} parent=11 // pred_check
          %p171 = pneg %p85
        $region18: #{tpu_custom_call.1} parent=11 // pred_check_branch
          %173 = sbr.rel (%p171) target = $region20
        $region19: #{tpu_custom_call.1} parent=11 // pred_region
          _
        $region20: #{tpu_custom_call.1} parent=11 // pred_fallthru
          _
        // Predicated region
        $region21: #{tpu_custom_call.1} parent=11 // pred_check
          %p174 = pneg %p106
        $region22: #{tpu_custom_call.1} parent=11 // pred_check_branch
          %176 = sbr.rel (%p174) target = $region24
        $region23: #{tpu_custom_call.1} parent=11 // pred_region
          _
        $region24: #{tpu_custom_call.1} parent=11 // pred_fallthru
          _
        // Predicated region
        $region25: #{tpu_custom_call.1} parent=11 // pred_check
          %p177 = pneg %p127
        $region26: #{tpu_custom_call.1} parent=11 // pred_check_branch
          %179 = sbr.rel (%p177) target = $region28
        $region27: #{tpu_custom_call.1} parent=11 // pred_region
          _
        $region28: #{tpu_custom_call.1} parent=11 // pred_fallthru
          _
      $region12: #{tpu_custom_call.1} parent=5 // pred_fallthru
        _
      %p180 = scmp.lt.s32.totalorder %s17, 2
      // Predicated region
      $region29: #{tpu_custom_call.1} parent=5 // pred_check
        %p181 = pneg %p180
      $region30: #{tpu_custom_call.1} parent=5 // pred_check_branch
        %183 = sbr.rel (%p181) target = $region32
      $region31: #{tpu_custom_call.1} parent=5 // pred_region
        // Predicated region
        $region33: #{tpu_custom_call.1} parent=31 // pred_check
          %p184 = pneg %p37
        $region34: #{tpu_custom_call.1} parent=31 // pred_check_branch
          %186 = sbr.rel (%p184) target = $region36
        $region35: #{tpu_custom_call.1} parent=31 // pred_region
          %s187 = sand.u32 %s27, 1
          %s188 = scalar_lea.sflag [#allocation3], %s187
          %s189 = sand.u32 %s27, 1
          %s190 = smul.addr %s189, 256
          %s191 = scalar_lea.vmem [#allocation2], %s190
          %s192 = smul.u32 4, %s17
          %s194 = ssub.s32 4096, 4096
          %195 = vsyncadd %s188, %s194
          %s196 = smul.addr %s192, 8
          %s197 = smul.addr %s196, 128
          %s198 = scalar_lea.hbm %s0, %s197
          %s199 = sshll.u32 %s191, 4
          %s200 = int_to_ptr.vmem [resolvable:$true] %s199
          %205 = dma.hbm_to_vmem [thread:$0]  %s198, 4096, %s200, %s188, 256, 256, 16
        $region36: #{tpu_custom_call.1} parent=31 // pred_fallthru
          _
      $region32: #{tpu_custom_call.1} parent=5 // pred_fallthru
        _
      %p206 = scmp.le.s32.totalorder 1, %s17
      %p207 = scmp.lt.s32.totalorder %s17, 3
      %p208 = pnand %p206, %p207
      %p209 = pneg %p208
      // Predicated region
      $region37: #{tpu_custom_call.1} parent=5 // pred_check
        _
      $region38: #{tpu_custom_call.1} parent=5 // pred_check_branch
        %211 = sbr.rel (%p208) target = $region40
      $region39: #{tpu_custom_call.1} parent=5 // pred_region
        %s212 = ssub.s32 %s17, 1
        %s213 = sand.u32 %s30, 1
        %s214 = scalar_lea.sflag [#allocation3], %s213
        %s215 = sand.u32 %s30, 1
        %s216 = smul.addr %s215, 256
        %s217 = scalar_lea.vmem [#allocation2], %s216
        // Predicated region
        $region41: #{tpu_custom_call.1} parent=39 // pred_check
          %p218 = pneg %p43
        $region42: #{tpu_custom_call.1} parent=39 // pred_check_branch
          %220 = sbr.rel (%p218) target = $region44
        $region43: #{tpu_custom_call.1} parent=39 // pred_region
          %221 = dma.done %s214, 4096
        $region44: #{tpu_custom_call.1} parent=39 // pred_fallthru
          _
        %s222 = sand.u32 %s30, 1
        %s223 = scalar_lea.sflag [#allocation3], %s222
        %s224 = sand.u32 %s30, 1
        %s225 = smul.addr %s224, 256
        %s226 = scalar_lea.vmem [#allocation2], %s225
        %p227 = pneg %p43
        %p228 = pneg %p40
        %p229 = pneg %p64
        %p230 = pneg %p61
        %p231 = pneg %p85
        %p232 = pneg %p82
        %p233 = pneg %p106
        %p234 = pneg %p103
        %p235 = pneg %p127
        %p236 = pneg %p124
        %p237 = pneg %p153
        %p238 = pneg %p150
        %s239 = sand.u32 %s140, 1
        %s240 = scalar_lea.sflag [#allocation4], %s239
        %s241 = sand.u32 %s140, 1
        %s242 = smul.addr %s241, 256
        %s243 = scalar_lea.vmem [#allocation5], %s242
        %s244 = smul.u32 4, %s22
        %s245 = smul.u32 4, %s22
        %v246 = vld [vmem:[%s217] sm:$0xff]
        %v247 = vld [vmem:[%s217 + $0x8] sm:$0xff]
        %v248 = vld [vmem:[%s217 + $0x10] sm:$0xff]
        %v249 = vld [vmem:[%s217 + $0x18] sm:$0xff]
        %v250 = vld [vmem:[%s217 + $0x20] sm:$0xff]
        %v251 = vld [vmem:[%s217 + $0x28] sm:$0xff]
        %v252 = vld [vmem:[%s217 + $0x30] sm:$0xff]
        %v253 = vld [vmem:[%s217 + $0x38] sm:$0xff]
        %v254 = vld [vmem:[%s217 + $0x40] sm:$0xff]
        %v255 = vld [vmem:[%s217 + $0x48] sm:$0xff]
        %v256 = vld [vmem:[%s217 + $0x50] sm:$0xff]
        %v257 = vld [vmem:[%s217 + $0x58] sm:$0xff]
        %v258 = vld [vmem:[%s217 + $0x60] sm:$0xff]
        %v259 = vld [vmem:[%s217 + $0x68] sm:$0xff]
        %v260 = vld [vmem:[%s217 + $0x70] sm:$0xff]
        %v261 = vld [vmem:[%s217 + $0x78] sm:$0xff]
        %v262 = vld [vmem:[%s217 + $0x80] sm:$0xff]
        %v263 = vld [vmem:[%s217 + $0x88] sm:$0xff]
        %v264 = vld [vmem:[%s217 + $0x90] sm:$0xff]
        %v265 = vld [vmem:[%s217 + $0x98] sm:$0xff]
        %v266 = vld [vmem:[%s217 + $0xa0] sm:$0xff]
        %v267 = vld [vmem:[%s217 + $0xa8] sm:$0xff]
        %v268 = vld [vmem:[%s217 + $0xb0] sm:$0xff]
        %v269 = vld [vmem:[%s217 + $0xb8] sm:$0xff]
        %v270 = vld [vmem:[%s217 + $0xc0] sm:$0xff]
        %v271 = vld [vmem:[%s217 + $0xc8] sm:$0xff]
        %v272 = vld [vmem:[%s217 + $0xd0] sm:$0xff]
        %v273 = vld [vmem:[%s217 + $0xd8] sm:$0xff]
        %v274 = vld [vmem:[%s217 + $0xe0] sm:$0xff]
        %v275 = vld [vmem:[%s217 + $0xe8] sm:$0xff]
        %v276 = vld [vmem:[%s217 + $0xf0] sm:$0xff]
        %v277 = vld [vmem:[%s217 + $0xf8] sm:$0xff]
        %v278 = vadd.f32 %v246, %v247
        %279 = vadd.xlane.f32.xlu0 %v278
        %v280 = vpop.xlane.xlu0 %279
        %v281 = vadd.f32 %v248, %v249
        %282 = vadd.xlane.f32.xlu0 %v281
        %v283 = vpop.xlane.xlu0 %282
        %v284 = vadd.f32 %v250, %v251
        %285 = vadd.xlane.f32.xlu0 %v284
        %v286 = vpop.xlane.xlu0 %285
        %v287 = vadd.f32 %v252, %v253
        %288 = vadd.xlane.f32.xlu0 %v287
        %v289 = vpop.xlane.xlu0 %288
        %v290 = vadd.f32 %v254, %v255
        %291 = vadd.xlane.f32.xlu0 %v290
        %v292 = vpop.xlane.xlu0 %291
        %v293 = vadd.f32 %v256, %v257
        %294 = vadd.xlane.f32.xlu0 %v293
        %v295 = vpop.xlane.xlu0 %294
        %v296 = vadd.f32 %v258, %v259
        %297 = vadd.xlane.f32.xlu0 %v296
        %v298 = vpop.xlane.xlu0 %297
        %v299 = vadd.f32 %v260, %v261
        %300 = vadd.xlane.f32.xlu0 %v299
        %v301 = vpop.xlane.xlu0 %300
        %v302 = vadd.f32 %v262, %v263
        %303 = vadd.xlane.f32.xlu0 %v302
        %v304 = vpop.xlane.xlu0 %303
        %v305 = vadd.f32 %v264, %v265
        %306 = vadd.xlane.f32.xlu0 %v305
        %v307 = vpop.xlane.xlu0 %306
        %v308 = vadd.f32 %v266, %v267
        %309 = vadd.xlane.f32.xlu0 %v308
        %v310 = vpop.xlane.xlu0 %309
        %v311 = vadd.f32 %v268, %v269
        %312 = vadd.xlane.f32.xlu0 %v311
        %v313 = vpop.xlane.xlu0 %312
        %v314 = vadd.f32 %v270, %v271
        %315 = vadd.xlane.f32.xlu0 %v314
        %v316 = vpop.xlane.xlu0 %315
        %v317 = vadd.f32 %v272, %v273
        %318 = vadd.xlane.f32.xlu0 %v317
        %v319 = vpop.xlane.xlu0 %318
        %v320 = vadd.f32 %v274, %v275
        %321 = vadd.xlane.f32.xlu0 %v320
        %v322 = vpop.xlane.xlu0 %321
        %v323 = vadd.f32 %v276, %v277
        %324 = vadd.xlane.f32.xlu0 %v323
        %v325 = vpop.xlane.xlu0 %324
        %v326 = vrcp.pop 256.0
        %v327 = vmul.f32 %v280, %v326
        %v328 = vmul.f32 %v283, %v326
        %v329 = vmul.f32 %v286, %v326
        %v330 = vmul.f32 %v289, %v326
        %v331 = vmul.f32 %v292, %v326
        %v332 = vmul.f32 %v295, %v326
        %v333 = vmul.f32 %v298, %v326
        %v334 = vmul.f32 %v301, %v326
        %v335 = vmul.f32 %v304, %v326
        %v336 = vmul.f32 %v307, %v326
        %v337 = vmul.f32 %v310, %v326
        %v338 = vmul.f32 %v313, %v326
        %v339 = vmul.f32 %v316, %v326
        %v340 = vmul.f32 %v319, %v326
        %v341 = vmul.f32 %v322, %v326
        %v342 = vmul.f32 %v325, %v326
        %v343 = vld [vmem:[%s1] sm:$0xff]
        %v344 = vld [vmem:[%s1 + $0x8] sm:$0xff]
        %v345 = vld [vmem:[%s1 + $0x10] sm:$0xff]
        %v346 = vld [vmem:[%s1 + $0x18] sm:$0xff]
        %v347 = vld [vmem:[%s2] sm:$0x1]
        %v349 = vlaneseq
        %v350 = vshrl.u32 %v349, 7
        %v351 = vsub.s32 0, %v350
        %v352 = vrot.slane %v347, %v351
        %v370 = vlaneseq
        %v371 = vand.u32 %v370, 127
        %v372 = vlaneseq
        %v373 = vshrl.u32 %v372, 7
        %v374 = vsub.s32 %v371, %v373
        %v375 = vrot.slane %v327, %v374
        %v376 = vadd.s32 %v371, 4294967288
        %v377 = vlaneseq
        %v378 = vshrl.u32 %v377, 7
        %v379 = vsub.s32 %v376, %v378
        %v380 = vrot.slane %v328, %v379
        %vm381 = vcmask 130112
        %v382 = vsel %vm381, %v380, %v375
        %v383 = vadd.s32 %v371, 4294967280
        %v384 = vlaneseq
        %v385 = vshrl.u32 %v384, 7
        %v386 = vsub.s32 %v383, %v385
        %v387 = vrot.slane %v329, %v386
        %vm388 = vcmask 195712
        %v389 = vsel %vm388, %v387, %v382
        %v390 = vadd.s32 %v371, 4294967272
        %v391 = vlaneseq
        %v392 = vshrl.u32 %v391, 7
        %v393 = vsub.s32 %v390, %v392
        %v394 = vrot.slane %v330, %v393
        %vm395 = vcmask 261312
        %v396 = vsel %vm395, %v394, %v389
        %v397 = vlaneseq
        %v398 = vshrl.u32 %v397, 7
        %v399 = vsub.s32 %v371, %v398
        %v400 = vrot.slane %v331, %v399
        %v401 = vlaneseq
        %v402 = vshrl.u32 %v401, 7
        %v403 = vsub.s32 %v376, %v402
        %v404 = vrot.slane %v332, %v403
        %v405 = vsel %vm381, %v404, %v400
        %v406 = vlaneseq
        %v407 = vshrl.u32 %v406, 7
        %v408 = vsub.s32 %v383, %v407
        %v409 = vrot.slane %v333, %v408
        %v410 = vsel %vm388, %v409, %v405
        %v411 = vlaneseq
        %v412 = vshrl.u32 %v411, 7
        %v413 = vsub.s32 %v390, %v412
        %v414 = vrot.slane %v334, %v413
        %v415 = vsel %vm395, %v414, %v410
        %v416 = vlaneseq
        %v417 = vshrl.u32 %v416, 7
        %v418 = vsub.s32 %v371, %v417
        %v419 = vrot.slane %v335, %v418
        %v420 = vlaneseq
        %v421 = vshrl.u32 %v420, 7
        %v422 = vsub.s32 %v376, %v421
        %v423 = vrot.slane %v336, %v422
        %v424 = vsel %vm381, %v423, %v419
        %v425 = vlaneseq
        %v426 = vshrl.u32 %v425, 7
        %v427 = vsub.s32 %v383, %v426
        %v428 = vrot.slane %v337, %v427
        %v429 = vsel %vm388, %v428, %v424
        %v430 = vlaneseq
        %v431 = vshrl.u32 %v430, 7
        %v432 = vsub.s32 %v390, %v431
        %v433 = vrot.slane %v338, %v432
        %v434 = vsel %vm395, %v433, %v429
        %v435 = vlaneseq
        %v436 = vshrl.u32 %v435, 7
        %v437 = vsub.s32 %v371, %v436
        %v438 = vrot.slane %v339, %v437
        %v439 = vlaneseq
        %v440 = vshrl.u32 %v439, 7
        %v441 = vsub.s32 %v376, %v440
        %v442 = vrot.slane %v340, %v441
        %v443 = vsel %vm381, %v442, %v438
        %v444 = vlaneseq
        %v445 = vshrl.u32 %v444, 7
        %v446 = vsub.s32 %v383, %v445
        %v447 = vrot.slane %v341, %v446
        %v448 = vsel %vm388, %v447, %v443
        %v449 = vlaneseq
        %v450 = vshrl.u32 %v449, 7
        %v451 = vsub.s32 %v390, %v450
        %v452 = vrot.slane %v342, %v451
        %v453 = vsel %vm395, %v452, %v448
        %vm454 = vcmask 1041409
        %v455 = vsel %vm454, %v415, %v396
        %vm456 = vcmask 1042434
        %v457 = vsel %vm456, %v434, %v455
        %vm458 = vcmask 1043459
        %v459 = vsel %vm458, %v453, %v457
        %vm460 = vcmask 261120
        %v461 = vsel %vm460, %v459, 0
        %463 = vmatprep.subr.mxu0 0.0
        %464 = vmatpush1.msra.mxu0 %v343
        %465 = vmatprep.subr.mxu0 0.0
        %466 = vmatpush1.msra.mxu0 %v344
        %467 = vmatprep.subr.mxu0 0.0
        %468 = vmatpush1.msra.mxu0 %v345
        %469 = vmatprep.subr.mxu0 0.0
        %470 = vmatpush1.msra.mxu0 %v346
        %471 = vmatprep.subr.mxu0 0.0
        %472 = vmatpush1.msra.mxu0 0.0
        %473 = vmatprep.subr.mxu0 0.0
        %474 = vmatpush1.msra.mxu0 0.0
        %475 = vmatprep.subr.mxu0 0.0
        %476 = vmatpush1.msra.mxu0 0.0
        %477 = vmatprep.subr.mxu0 0.0
        %478 = vmatpush1.msra.mxu0 0.0
        %479 = vmatprep.subr.mxu0 0.0
        %480 = vmatpush1.msra.mxu0 0.0
        %481 = vmatprep.subr.mxu0 0.0
        %482 = vmatpush1.msra.mxu0 0.0
        %483 = vmatprep.subr.mxu0 0.0
        %484 = vmatpush1.msra.mxu0 0.0
        %485 = vmatprep.subr.mxu0 0.0
        %486 = vmatpush1.msra.mxu0 0.0
        %487 = vmatprep.subr.mxu0 0.0
        %488 = vmatpush1.msra.mxu0 0.0
        %489 = vmatprep.subr.mxu0 0.0
        %490 = vmatpush1.msra.mxu0 0.0
        %491 = vmatprep.subr.mxu0 0.0
        %492 = vmatpush1.msra.mxu0 0.0
        %493 = vmatprep.subr.mxu0 0.0
        %494 = vmatpush1.msra.mxu0 0.0
        %495 = vmatprep.subr.mxu0 0.0
        %496 = vmatpush1.msra.mxu0 0.0
        %497 = vmatprep.subr.mxu0 0.0
        %498 = vmatpush1.msra.mxu0 0.0
        %499 = vmatprep.subr.mxu0 0.0
        %500 = vmatpush1.msra.mxu0 0.0
        %501 = vmatprep.subr.mxu0 0.0
        %502 = vmatpush1.msra.mxu0 0.0
        %503 = vmatprep.subr.mxu0 0.0
        %504 = vmatpush1.msra.mxu0 0.0
        %505 = vmatprep.subr.mxu0 0.0
        %506 = vmatpush1.msra.mxu0 0.0
        %507 = vmatprep.subr.mxu0 0.0
        %508 = vmatpush1.msra.mxu0 0.0
        %509 = vmatprep.subr.mxu0 0.0
        %510 = vmatpush1.msra.mxu0 0.0
        %511 = vmatprep.subr.mxu0 0.0
        %512 = vmatpush1.msra.mxu0 0.0
        %513 = vmatprep.subr.mxu0 0.0
        %514 = vmatpush1.msra.mxu0 0.0
        %515 = vmatprep.subr.mxu0 0.0
        %516 = vmatpush1.msra.mxu0 0.0
        %517 = vmatprep.subr.mxu0 0.0
        %518 = vmatpush1.msra.mxu0 0.0
        %519 = vmatprep.subr.mxu0 0.0
        %520 = vmatpush1.msra.mxu0 0.0
        %521 = vmatprep.subr.mxu0 0.0
        %522 = vmatpush1.msra.mxu0 0.0
        %523 = vmatprep.subr.mxu0 0.0
        %524 = vmatpush1.msra.mxu0 0.0
        %525 = vmatprep.subr.mxu0 0.0
        %526 = vmatpush1.msra.mxu0 0.0
        %527 = vmatprep.mubr.f32.mxu0 0.0
        %528 = vmatmul.mubr.f32.gmra.mrb[0].mxu0 %v461
        %v529 = vpop.f32.mrb[0].mxu0
        %v530 = vadd.f32 %v352, %v529
        %v531 = vpop.f32.mrb[0].mxu0
        %532 = vdwg.mxu0
        %v533 = vmax.f32 %v530, 0.0
        %v534 = vld [vmem:[%s3] sm:$0x3]
        %v535 = vld [vmem:[%s4] sm:$0x1]
        %v537 = vlaneseq
        %v538 = vshrl.u32 %v537, 7
        %v539 = vsub.s32 0, %v538
        %v540 = vrot.slane %v535, %v539
        %vm542 = vcmask 15360
        %v544 = vsel %vm542, %v533, 0
        %vm546 = vcmask 1041408
        %v548 = vsel %vm546, %v534, 0
        %550 = vmatprep.subr.mxu0 0.0
        %551 = vmatpush1.msra.mxu0 %v548
        %552 = vmatprep.subr.mxu0 0.0
        %553 = vmatpush1.msra.mxu0 0.0
        %554 = vmatprep.subr.mxu0 0.0
        %555 = vmatpush1.msra.mxu0 0.0
        %556 = vmatprep.subr.mxu0 0.0
        %557 = vmatpush1.msra.mxu0 0.0
        %558 = vmatprep.subr.mxu0 0.0
        %559 = vmatpush1.msra.mxu0 0.0
        %560 = vmatprep.subr.mxu0 0.0
        %561 = vmatpush1.msra.mxu0 0.0
        %562 = vmatprep.subr.mxu0 0.0
        %563 = vmatpush1.msra.mxu0 0.0
        %564 = vmatprep.subr.mxu0 0.0
        %565 = vmatpush1.msra.mxu0 0.0
        %566 = vmatprep.subr.mxu0 0.0
        %567 = vmatpush1.msra.mxu0 0.0
        %568 = vmatprep.subr.mxu0 0.0
        %569 = vmatpush1.msra.mxu0 0.0
        %570 = vmatprep.subr.mxu0 0.0
        %571 = vmatpush1.msra.mxu0 0.0
        %572 = vmatprep.subr.mxu0 0.0
        %573 = vmatpush1.msra.mxu0 0.0
        %574 = vmatprep.subr.mxu0 0.0
        %575 = vmatpush1.msra.mxu0 0.0
        %576 = vmatprep.subr.mxu0 0.0
        %577 = vmatpush1.msra.mxu0 0.0
        %578 = vmatprep.subr.mxu0 0.0
        %579 = vmatpush1.msra.mxu0 0.0
        %580 = vmatprep.subr.mxu0 0.0
        %581 = vmatpush1.msra.mxu0 0.0
        %582 = vmatprep.subr.mxu0 0.0
        %583 = vmatpush1.msra.mxu0 0.0
        %584 = vmatprep.subr.mxu0 0.0
        %585 = vmatpush1.msra.mxu0 0.0
        %586 = vmatprep.subr.mxu0 0.0
        %587 = vmatpush1.msra.mxu0 0.0
        %588 = vmatprep.subr.mxu0 0.0
        %589 = vmatpush1.msra.mxu0 0.0
        %590 = vmatprep.subr.mxu0 0.0
        %591 = vmatpush1.msra.mxu0 0.0
        %592 = vmatprep.subr.mxu0 0.0
        %593 = vmatpush1.msra.mxu0 0.0
        %594 = vmatprep.subr.mxu0 0.0
        %595 = vmatpush1.msra.mxu0 0.0
        %596 = vmatprep.subr.mxu0 0.0
        %597 = vmatpush1.msra.mxu0 0.0
        %598 = vmatprep.subr.mxu0 0.0
        %599 = vmatpush1.msra.mxu0 0.0
        %600 = vmatprep.subr.mxu0 0.0
        %601 = vmatpush1.msra.mxu0 0.0
        %602 = vmatprep.subr.mxu0 0.0
        %603 = vmatpush1.msra.mxu0 0.0
        %604 = vmatprep.subr.mxu0 0.0
        %605 = vmatpush1.msra.mxu0 0.0
        %606 = vmatprep.subr.mxu0 0.0
        %607 = vmatpush1.msra.mxu0 0.0
        %608 = vmatprep.subr.mxu0 0.0
        %609 = vmatpush1.msra.mxu0 0.0
        %610 = vmatprep.subr.mxu0 0.0
        %611 = vmatpush1.msra.mxu0 0.0
        %612 = vmatprep.subr.mxu0 0.0
        %613 = vmatpush1.msra.mxu0 0.0
        %614 = vmatprep.mubr.f32.mxu0 0.0
        %615 = vmatmul.mubr.f32.gmra.mrb[0].mxu0 %v544
        %v616 = vpop.f32.mrb[0].mxu0
        %v617 = vadd.f32 %v540, %v616
        %v618 = vpop.f32.mrb[0].mxu0
        %619 = vdwg.mxu0
        %v620 = vxor.u32 %v617, 2147483648
        %v621 = vmul.f32 %v620, 1.442695
        %v622 = vpow.pop %v621
        %v623 = vadd.f32 %v622, 1.0
        %v624 = vrcp.pop %v623
        %v625 = vmul.f32 1.0, %v624
        %v626 = vmul.f32 %v625, 0.5
        %v627 = vadd.f32 %v626, 0.5
        %v628 = vlaneseq
        %v629 = vshrl.u32 %v628, 7
        %v630 = vsub.s32 0, %v629
        %v631 = vrot.slane %v627, %v630
        %633 = vbcast.lane.b32.xlu0 %v631, 256
        %v634 = vpop.permute.xlu0 %633
        %s636 = sor.u32 256, 8
        %637 = vbcast.lane.b32.xlu0 %v631, %s636
        %v638 = vpop.permute.xlu0 %637
        %s640 = sor.u32 256, 16
        %641 = vbcast.lane.b32.xlu0 %v631, %s640
        %v642 = vpop.permute.xlu0 %641
        %s644 = sor.u32 256, 24
        %645 = vbcast.lane.b32.xlu0 %v631, %s644
        %v646 = vpop.permute.xlu0 %645
        %v647 = vlaneseq
        %v648 = vshrl.u32 %v647, 7
        %v649 = vsub.s32 1, %v648
        %v650 = vrot.slane %v627, %v649
        %652 = vbcast.lane.b32.xlu0 %v650, 256
        %v653 = vpop.permute.xlu0 %652
        %s655 = sor.u32 256, 8
        %656 = vbcast.lane.b32.xlu0 %v650, %s655
        %v657 = vpop.permute.xlu0 %656
        %s659 = sor.u32 256, 16
        %660 = vbcast.lane.b32.xlu0 %v650, %s659
        %v661 = vpop.permute.xlu0 %660
        %s663 = sor.u32 256, 24
        %664 = vbcast.lane.b32.xlu0 %v650, %s663
        %v665 = vpop.permute.xlu0 %664
        %v666 = vlaneseq
        %v667 = vshrl.u32 %v666, 7
        %v668 = vsub.s32 2, %v667
        %v669 = vrot.slane %v627, %v668
        %671 = vbcast.lane.b32.xlu0 %v669, 256
        %v672 = vpop.permute.xlu0 %671
        %s674 = sor.u32 256, 8
        %675 = vbcast.lane.b32.xlu0 %v669, %s674
        %v676 = vpop.permute.xlu0 %675
        %s678 = sor.u32 256, 16
        %679 = vbcast.lane.b32.xlu0 %v669, %s678
        %v680 = vpop.permute.xlu0 %679
        %s682 = sor.u32 256, 24
        %683 = vbcast.lane.b32.xlu0 %v669, %s682
        %v684 = vpop.permute.xlu0 %683
        %v685 = vlaneseq
        %v686 = vshrl.u32 %v685, 7
        %v687 = vsub.s32 3, %v686
        %v688 = vrot.slane %v627, %v687
        %690 = vbcast.lane.b32.xlu0 %v688, 256
        %v691 = vpop.permute.xlu0 %690
        %s693 = sor.u32 256, 8
        %694 = vbcast.lane.b32.xlu0 %v688, %s693
        %v695 = vpop.permute.xlu0 %694
        %s697 = sor.u32 256, 16
        %698 = vbcast.lane.b32.xlu0 %v688, %s697
        %v699 = vpop.permute.xlu0 %698
        %s701 = sor.u32 256, 24
        %702 = vbcast.lane.b32.xlu0 %v688, %s701
        %v703 = vpop.permute.xlu0 %702
        %v704 = vmul.f32 %v246, %v634
        %v705 = vmul.f32 %v247, %v634
        %v706 = vmul.f32 %v248, %v638
        %v707 = vmul.f32 %v249, %v638
        %v708 = vmul.f32 %v250, %v642
        %v709 = vmul.f32 %v251, %v642
        %v710 = vmul.f32 %v252, %v646
        %v711 = vmul.f32 %v253, %v646
        %v712 = vmul.f32 %v254, %v653
        %v713 = vmul.f32 %v255, %v653
        %v714 = vmul.f32 %v256, %v657
        %v715 = vmul.f32 %v257, %v657
        %v716 = vmul.f32 %v258, %v661
        %v717 = vmul.f32 %v259, %v661
        %v718 = vmul.f32 %v260, %v665
        %v719 = vmul.f32 %v261, %v665
        %v720 = vmul.f32 %v262, %v672
        %v721 = vmul.f32 %v263, %v672
        %v722 = vmul.f32 %v264, %v676
        %v723 = vmul.f32 %v265, %v676
        %v724 = vmul.f32 %v266, %v680
        %v725 = vmul.f32 %v267, %v680
        %v726 = vmul.f32 %v268, %v684
        %v727 = vmul.f32 %v269, %v684
        %v728 = vmul.f32 %v270, %v691
        %v729 = vmul.f32 %v271, %v691
        %v730 = vmul.f32 %v272, %v695
        %v731 = vmul.f32 %v273, %v695
        %v732 = vmul.f32 %v274, %v699
        %v733 = vmul.f32 %v275, %v699
        %v734 = vmul.f32 %v276, %v703
        %v735 = vmul.f32 %v277, %v703
        %736 = vst [vmem:[%s243] sm:$0xff] %v704
        %737 = vst [vmem:[%s243 + $0x8] sm:$0xff] %v705
        %738 = vst [vmem:[%s243 + $0x10] sm:$0xff] %v706
        %739 = vst [vmem:[%s243 + $0x18] sm:$0xff] %v707
        %740 = vst [vmem:[%s243 + $0x20] sm:$0xff] %v708
        %741 = vst [vmem:[%s243 + $0x28] sm:$0xff] %v709
        %742 = vst [vmem:[%s243 + $0x30] sm:$0xff] %v710
        %743 = vst [vmem:[%s243 + $0x38] sm:$0xff] %v711
        %744 = vst [vmem:[%s243 + $0x40] sm:$0xff] %v712
        %745 = vst [vmem:[%s243 + $0x48] sm:$0xff] %v713
        %746 = vst [vmem:[%s243 + $0x50] sm:$0xff] %v714
        %747 = vst [vmem:[%s243 + $0x58] sm:$0xff] %v715
        %748 = vst [vmem:[%s243 + $0x60] sm:$0xff] %v716
        %749 = vst [vmem:[%s243 + $0x68] sm:$0xff] %v717
        %750 = vst [vmem:[%s243 + $0x70] sm:$0xff] %v718
        %751 = vst [vmem:[%s243 + $0x78] sm:$0xff] %v719
        %752 = vst [vmem:[%s243 + $0x80] sm:$0xff] %v720
        %753 = vst [vmem:[%s243 + $0x88] sm:$0xff] %v721
        %754 = vst [vmem:[%s243 + $0x90] sm:$0xff] %v722
        %755 = vst [vmem:[%s243 + $0x98] sm:$0xff] %v723
        %756 = vst [vmem:[%s243 + $0xa0] sm:$0xff] %v724
        %757 = vst [vmem:[%s243 + $0xa8] sm:$0xff] %v725
        %758 = vst [vmem:[%s243 + $0xb0] sm:$0xff] %v726
        %759 = vst [vmem:[%s243 + $0xb8] sm:$0xff] %v727
        %760 = vst [vmem:[%s243 + $0xc0] sm:$0xff] %v728
        %761 = vst [vmem:[%s243 + $0xc8] sm:$0xff] %v729
        %762 = vst [vmem:[%s243 + $0xd0] sm:$0xff] %v730
        %763 = vst [vmem:[%s243 + $0xd8] sm:$0xff] %v731
        %764 = vst [vmem:[%s243 + $0xe0] sm:$0xff] %v732
        %765 = vst [vmem:[%s243 + $0xe8] sm:$0xff] %v733
        %766 = vst [vmem:[%s243 + $0xf0] sm:$0xff] %v734
        %767 = vst [vmem:[%s243 + $0xf8] sm:$0xff] %v735
        %s768 = sand.u32 %s140, 1
        %s769 = scalar_lea.sflag [#allocation4], %s768
        %s770 = sand.u32 %s140, 1
        %s771 = smul.addr %s770, 256
        %s772 = scalar_lea.vmem [#allocation5], %s771
        // Predicated region
        $region45: #{tpu_custom_call.1} parent=39 // pred_check
          %p773 = pneg %p150
        $region46: #{tpu_custom_call.1} parent=39 // pred_check_branch
          %775 = sbr.rel (%p773) target = $region48
        $region47: #{tpu_custom_call.1} parent=39 // pred_region
          %s776 = smul.u32 4, %s22
          %s778 = ssub.s32 4096, 4096
          %779 = vsyncadd %s769, %s778
          %s780 = smul.addr %s776, 8
          %s781 = smul.addr %s780, 128
          %s782 = scalar_lea.hbm %s5, %s781
          %s783 = sshll.u32 %s772, 4
          %s784 = int_to_ptr.vmem [resolvable:$true] %s783
          %789 = dma.vmem_to_hbm [thread:$0]  %s784, 4096, %s782, %s769, 256, 256, 16
        $region48: #{tpu_custom_call.1} parent=39 // pred_fallthru
          _
      $region40: #{tpu_custom_call.1} parent=5 // pred_fallthru
        _
      %p790 = scmp.le.s32.totalorder 2, %s17
      // Predicated region
      $region49: #{tpu_custom_call.1} parent=5 // pred_check
        %p791 = pneg %p790
      $region50: #{tpu_custom_call.1} parent=5 // pred_check_branch
        %793 = sbr.rel (%p791) target = $region52
      $region51: #{tpu_custom_call.1} parent=5 // pred_region
        %s794 = ssub.s32 %s17, 2
        // Predicated region
        $region53: #{tpu_custom_call.1} parent=51 // pred_check
          %p795 = pneg %p156
        $region54: #{tpu_custom_call.1} parent=51 // pred_check_branch
          %797 = sbr.rel (%p795) target = $region56
        $region55: #{tpu_custom_call.1} parent=51 // pred_region
          %s798 = sand.u32 %s141, 1
          %s799 = scalar_lea.sflag [#allocation4], %s798
          %s800 = sand.u32 %s141, 1
          %s801 = smul.addr %s800, 256
          %s802 = scalar_lea.vmem [#allocation5], %s801
          %803 = dma.done %s799, 4096
        $region56: #{tpu_custom_call.1} parent=51 // pred_fallthru
          _
      $region52: #{tpu_custom_call.1} parent=5 // pred_fallthru
        _
    $region6: #{tpu_custom_call.1} parent=1 // loop_footer
      %s21 = sadd.s32 1, %s17
    $region7: #{tpu_custom_call.1} parent=1 // loop_footer_branch
      %16 = sbr.rel target = $region3
    $region8: #{tpu_custom_call.1} parent=1 // loop_exit
      _
    %804 = vsyncpa [#allocation3], 1
    %s805 = scalar_lea.sflag [#allocation3], 1
    %806 = vsyncpa %s805, 1
    %807 = vsyncpa [#allocation4], 1
    %s808 = scalar_lea.sflag [#allocation4], 1
    %809 = vsyncpa %s808, 1

</llo_original>
